<compile_context>
chip_gen: v6e
topology: v6e:2x2x1
jax: 0.10.0
libtpu: 0.0.40
codegen_flags: <defaults>
</compile_context>

<pallas_src>
import functools

import jax
import jax.numpy as jnp
from jax.experimental import pallas as pl
from jax.experimental.pallas import tpu as pltpu


def _round_up(n, m):
    return ((n + m - 1) // m) * m


# ---------------------------------------------------------------------------
# Kernel
# ---------------------------------------------------------------------------
def _resnet_block_kernel(x_ref, w0_ref, b0_ref, w1_ref, b1_ref, *rest,
                         gaussian_c, has_proj):
    """One [TB, D_in_p] batch tile; all weights resident in VMEM."""
    if has_proj:
        ws_ref, o_ref = rest
    else:
        (o_ref,) = rest

    x = x_ref[...].astype(jnp.float32)

    def act(v):
        if gaussian_c is not None:
            # exp goes to the EUP slot; constant is folded at trace time.
            return jnp.exp(v * v * gaussian_c)
        return jnp.maximum(v, 0.0)

    # fc_0(act_0(x))
    h = act(x)
    h = jnp.dot(h, w0_ref[...], preferred_element_type=jnp.float32) + b0_ref[...]
    # fc_1(act_1(.))
    h = act(h)
    residual = jnp.dot(h, w1_ref[...], preferred_element_type=jnp.float32) + b1_ref[...]
    # shortcut: bias-free projection, or identity when D_in == D_out
    if has_proj:
        shortcut = jnp.dot(x, ws_ref[...], preferred_element_type=jnp.float32)
    else:
        shortcut = x

    # Single fused lane-dense store (residual + shortcut).
    o_ref[...] = (residual + shortcut).astype(o_ref.dtype)


# ---------------------------------------------------------------------------
# Wrapper
# ---------------------------------------------------------------------------
def _choose_batch_tile(batch, d_in, h, d_out, vmem_budget_bytes=32 * 1024 * 1024):
    """Largest multiple-of-8 batch tile that keeps weights + double-buffered
    activation tiles + f32 intermediates under a conservative VMEM budget
    (sized so it also fits v7x's smaller VMEM)."""
    weight_bytes = 4 * (d_in * h + h * d_out + d_in * d_out + h + d_out)
    # 2x double-buffered (TB,d_in) + (TB,d_out) tiles, plus live f32
    # intermediates (x, act(x), h pre/post act, residual, shortcut).
    per_row = 4 * (4 * d_in + 3 * h + 4 * d_out)
    avail = max(vmem_budget_bytes - 2 * weight_bytes, 1 << 20)
    tb = int(avail // per_row)
    tb = max(8, min(1024, (tb // 8) * 8))
    return tb


def resnet_block_forward(x, params, *, use_gaussian=False, gaussian_a=1.0):
    """x: [B, D_in].  params: dict with pre-transposed weights:
         w0 [D_in,H], b0 [1,H], w1 [H,D_out], b1 [1,D_out],
         ws [D_in,D_out] (absent when input_size == output_size)."""
    w0, b0 = params["w0"], params["b0"]
    w1, b1 = params["w1"], params["b1"]
    ws = params.get("ws", None)
    has_proj = ws is not None

    B, D_in = x.shape
    H = w0.shape[1]
    D_out = w1.shape[1]
    if not has_proj:
        assert D_in == D_out, "identity shortcut requires D_in == D_out"

    # ---- lane-dense padding of feature dims (multiples of 128) -------------
    D_in_p = _round_up(D_in, 128)
    H_p = _round_up(H, 128)
    D_out_p = _round_up(D_out, 128)

    # ---- batch tiling -------------------------------------------------------
    TB = _choose_batch_tile(B, D_in_p, H_p, D_out_p)
    TB = min(TB, _round_up(B, 8))
    B_pad = _round_up(B, TB)
    grid = (B_pad // TB,)

    # ---- zero-padded operands (zero pads contribute exactly 0 to the math) --
    xp = jnp.zeros((B_pad, D_in_p), x.dtype).at[:B, :D_in].set(x)
    w0p = jnp.zeros((D_in_p, H_p), w0.dtype).at[:D_in, :H].set(w0)
    b0p = jnp.zeros((1, H_p), b0.dtype).at[:, :H].set(b0.reshape(1, H))
    w1p = jnp.zeros((H_p, D_out_p), w1.dtype).at[:H, :D_out].set(w1)
    b1p = jnp.zeros((1, D_out_p), b1.dtype).at[:, :D_out].set(b1.reshape(1, D_out))
    operands = [xp, w0p, b0p, w1p, b1p]

    gaussian_c = (-0.5 / float(gaussian_a) ** 2) if use_gaussian else None
    kernel = functools.partial(_resnet_block_kernel,
                               gaussian_c=gaussian_c, has_proj=has_proj)

    def resident(a):  # full-array block, constant index map -> stays in VMEM
        return pl.BlockSpec(a.shape, lambda i, _nd=a.ndim: (0,) * _nd)

    in_specs = [
        pl.BlockSpec((TB, D_in_p), lambda i: (i, 0)),   # x: streamed per grid step
        resident(w0p), resident(b0p), resident(w1p), resident(b1p),
    ]
    if has_proj:
        wsp = jnp.zeros((D_in_p, D_out_p), ws.dtype).at[:D_in, :D_out].set(ws)
        in_specs.append(resident(wsp))
        operands.append(wsp)

    # ---- VMEM limit + cost estimate -----------------------------------------
    weight_bytes = 4 * (D_in_p * H_p + H_p * D_out_p
                        + (D_in_p * D_out_p if has_proj else 0) + H_p + D_out_p)
    est_vmem = (2 * weight_bytes
                + 2 * 4 * TB * (D_in_p + D_out_p)                 # dbl-buffered tiles
                + 4 * TB * (2 * D_in_p + 2 * H_p + 2 * D_out_p))  # f32 intermediates
    vmem_limit = int(min(max(2 * est_vmem, 8 << 20), 48 << 20))

    flops = 2 * B * (D_in * H + H * D_out + (D_in * D_out if has_proj else 0))
    transc = B * (D_in + H) if use_gaussian else 0
    bytes_acc = 4 * (B * D_in + B * D_out + D_in * H + H * D_out + H + D_out
                     + (D_in * D_out if has_proj else 0))
    cost = pl.CostEstimate(flops=flops, transcendentals=transc,
                           bytes_accessed=bytes_acc)

    out_p = pl.pallas_call(
        kernel,
        out_shape=jax.ShapeDtypeStruct((B_pad, D_out_p), x.dtype),
        grid=grid,
        in_specs=in_specs,
        out_specs=pl.BlockSpec((TB, D_out_p), lambda i: (i, 0)),
        compiler_params=pltpu.CompilerParams(
            dimension_semantics=("parallel",),   # megacore sharding on v7x
            vmem_limit_bytes=vmem_limit,
        ),
        cost_estimate=cost,
    )(*operands)

    return out_p[:B, :D_out]


# ---------------------------------------------------------------------------
# Reference + params
# ---------------------------------------------------------------------------
def init_params(key, input_size, hidden_size, output_size, dtype=jnp.float32):
    """PyTorch Linear shapes, pre-transposed to [in, out] for x @ W."""
    k0, k1, k2, k3, k4 = jax.random.split(key, 5)
    params = {
        "w0": jax.random.normal(k0, (input_size, hidden_size), dtype) * 0.1,
        "b0": jax.random.normal(k1, (1, hidden_size), dtype) * 0.1,
        "w1": jax.random.normal(k2, (hidden_size, output_size), dtype) * 0.1,
        "b1": jax.random.normal(k3, (1, output_size), dtype) * 0.1,
    }
    if input_size != output_size:
        params["ws"] = jax.random.normal(k4, (input_size, output_size), dtype) * 0.1
    return params


def resnet_block_ref(x, params, *, use_gaussian=False, gaussian_a=1.0):
    def act(v):
        if use_gaussian:
            return jnp.exp(-0.5 * v * v / (gaussian_a ** 2))
        return jnp.maximum(v, 0.0)
    h = act(x)
    h = h @ params["w0"] + params["b0"]
    h = act(h)
    residual = h @ params["w1"] + params["b1"]
    shortcut = x if params.get("ws", None) is None else x @ params["ws"]
    return residual + shortcut


if __name__ == "__main__":
    key = jax.random.PRNGKey(0)

    # Case 1: ReLU activations, projected shortcut (input_size != output_size).
    batch, input_size, hidden_size, output_size = 8, 32, 64, 16
    kx, kp, kx2, kp2 = jax.random.split(key, 4)
    x = jax.random.normal(kx, (batch, input_size), jnp.float32)
    params = init_params(kp, input_size, hidden_size, output_size)

    out = jax.block_until_ready(resnet_block_forward(x, params, use_gaussian=False))
    ref = resnet_block_ref(x, params, use_gaussian=False)
    assert out.shape == (batch, output_size), out.shape
    assert jnp.allclose(out, ref, atol=1e-4, rtol=1e-4), "mismatch (relu/proj)"

    # Case 2: Gaussian activations, identity shortcut (input_size == output_size).
    x2 = jax.random.normal(kx2, (batch, input_size), jnp.float32)
    params2 = init_params(kp2, input_size, hidden_size, input_size)
    out2 = jax.block_until_ready(
        resnet_block_forward(x2, params2, use_gaussian=True, gaussian_a=1.0))
    ref2 = resnet_block_ref(x2, params2, use_gaussian=True, gaussian_a=1.0)
    assert out2.shape == (batch, input_size), out2.shape
    assert jnp.allclose(out2, ref2, atol=1e-4, rtol=1e-4), "mismatch (gaussian/identity)"

    print("KERNEL_OK")
</pallas_src>

<mosaic_0001>
module attributes {stable_mosaic.version = 11 : i64} {
  func.func @_resnet_block_kernel(%arg0: i32, %arg1: memref<8x128xf32, #tpu.memory_space<vmem>>, %arg2: memref<128x128xf32, #tpu.memory_space<vmem>>, %arg3: memref<1x128xf32, #tpu.memory_space<vmem>>, %arg4: memref<128x128xf32, #tpu.memory_space<vmem>>, %arg5: memref<1x128xf32, #tpu.memory_space<vmem>>, %arg6: memref<128x128xf32, #tpu.memory_space<vmem>>, %arg7: memref<8x128xf32, #tpu.memory_space<vmem>>) attributes {dimension_semantics = [#tpu.dimension_semantics<parallel>], iteration_bounds = array<i64: 1>, scalar_prefetch = 0 : i64, scratch_operands = 0 : i64, tpu.core_type = #tpu.core_type<tc>, window_params = [{transform_indices = @transform_0, window_bounds = array<i64: 8, 128>}, {pipeline_mode = #tpu.pipeline_mode<synchronous>, transform_indices = @transform_1, window_bounds = array<i64: 128, 128>}, {pipeline_mode = #tpu.pipeline_mode<synchronous>, transform_indices = @transform_2, window_bounds = array<i64: 1, 128>}, {pipeline_mode = #tpu.pipeline_mode<synchronous>, transform_indices = @transform_3, window_bounds = array<i64: 128, 128>}, {pipeline_mode = #tpu.pipeline_mode<synchronous>, transform_indices = @transform_4, window_bounds = array<i64: 1, 128>}, {pipeline_mode = #tpu.pipeline_mode<synchronous>, transform_indices = @transform_5, window_bounds = array<i64: 128, 128>}, {transform_indices = @transform_6, window_bounds = array<i64: 8, 128>}]} {
    %c0 = arith.constant 0 : index
    %c0_0 = arith.constant 0 : index
    %0 = vector.load %arg1[%c0, %c0_0] : memref<8x128xf32, #tpu.memory_space<vmem>>, vector<8x128xf32>
    %cst = arith.constant 0.000000e+00 : f32
    %1 = vector.broadcast %cst : f32 to vector<8x128xf32>
    %2 = arith.maximumf %0, %1 : vector<8x128xf32>
    %c0_1 = arith.constant 0 : index
    %c0_2 = arith.constant 0 : index
    %3 = vector.load %arg2[%c0_1, %c0_2] : memref<128x128xf32, #tpu.memory_space<vmem>>, vector<128x128xf32>
    %cst_3 = arith.constant dense<0.000000e+00> : vector<8x128xf32>
    %4 = tpu.matmul %2, %3, %cst_3 {dimension_numbers = #tpu.dot_dimension_numbers<[1], [0], [0], [1], [0, 0, 1, 1], [], []>} : vector<8x128xf32>, vector<128x128xf32>, vector<8x128xf32> -> vector<8x128xf32>
    %c0_4 = arith.constant 0 : index
    %c0_5 = arith.constant 0 : index
    %5 = vector.load %arg3[%c0_4, %c0_5] : memref<1x128xf32, #tpu.memory_space<vmem>>, vector<1x128xf32>
    %6 = vector.broadcast %5 : vector<1x128xf32> to vector<8x128xf32>
    %7 = arith.addf %4, %6 : vector<8x128xf32>
    %cst_6 = arith.constant 0.000000e+00 : f32
    %8 = vector.broadcast %cst_6 : f32 to vector<8x128xf32>
    %9 = arith.maximumf %7, %8 : vector<8x128xf32>
    %c0_7 = arith.constant 0 : index
    %c0_8 = arith.constant 0 : index
    %10 = vector.load %arg4[%c0_7, %c0_8] : memref<128x128xf32, #tpu.memory_space<vmem>>, vector<128x128xf32>
    %cst_9 = arith.constant dense<0.000000e+00> : vector<8x128xf32>
    %11 = tpu.matmul %9, %10, %cst_9 {dimension_numbers = #tpu.dot_dimension_numbers<[1], [0], [0], [1], [0, 0, 1, 1], [], []>} : vector<8x128xf32>, vector<128x128xf32>, vector<8x128xf32> -> vector<8x128xf32>
    %c0_10 = arith.constant 0 : index
    %c0_11 = arith.constant 0 : index
    %12 = vector.load %arg5[%c0_10, %c0_11] : memref<1x128xf32, #tpu.memory_space<vmem>>, vector<1x128xf32>
    %13 = vector.broadcast %12 : vector<1x128xf32> to vector<8x128xf32>
    %14 = arith.addf %11, %13 : vector<8x128xf32>
    %c0_12 = arith.constant 0 : index
    %c0_13 = arith.constant 0 : index
    %15 = vector.load %arg6[%c0_12, %c0_13] : memref<128x128xf32, #tpu.memory_space<vmem>>, vector<128x128xf32>
    %cst_14 = arith.constant dense<0.000000e+00> : vector<8x128xf32>
    %16 = tpu.matmul %0, %15, %cst_14 {dimension_numbers = #tpu.dot_dimension_numbers<[1], [0], [0], [1], [0, 0, 1, 1], [], []>} : vector<8x128xf32>, vector<128x128xf32>, vector<8x128xf32> -> vector<8x128xf32>
    %17 = arith.addf %14, %16 : vector<8x128xf32>
    %c0_15 = arith.constant 0 : index
    %c0_16 = arith.constant 0 : index
    %18 = vector.load %arg7[%c0_15, %c0_16] : memref<8x128xf32, #tpu.memory_space<vmem>>, vector<8x128xf32>
    tpu.vector_store %arg7[%c0_15, %c0_16], %17 {strides = array<i32>} : memref<8x128xf32, #tpu.memory_space<vmem>>, vector<8x128xf32>,
    return
  }
  func.func @transform_0(%arg0: i32) -> (i32, i32) {
    %c0_i32 = arith.constant 0 : i32
    %c0_i32_0 = arith.constant 0 : i32
    return %arg0, %c0_i32 : i32, i32
  }
  func.func @transform_1(%arg0: i32) -> (i32, i32) {
    %c0_i32 = arith.constant 0 : i32
    %c0_i32_0 = arith.constant 0 : i32
    %c0_i32_1 = arith.constant 0 : i32
    return %c0_i32, %c0_i32_0 : i32, i32
  }
  func.func @transform_2(%arg0: i32) -> (i32, i32) {
    %c0_i32 = arith.constant 0 : i32
    %c0_i32_0 = arith.constant 0 : i32
    %c0_i32_1 = arith.constant 0 : i32
    return %c0_i32, %c0_i32_0 : i32, i32
  }
  func.func @transform_3(%arg0: i32) -> (i32, i32) {
    %c0_i32 = arith.constant 0 : i32
    %c0_i32_0 = arith.constant 0 : i32
    %c0_i32_1 = arith.constant 0 : i32
    return %c0_i32, %c0_i32_0 : i32, i32
  }
  func.func @transform_4(%arg0: i32) -> (i32, i32) {
    %c0_i32 = arith.constant 0 : i32
    %c0_i32_0 = arith.constant 0 : i32
    %c0_i32_1 = arith.constant 0 : i32
    return %c0_i32, %c0_i32_0 : i32, i32
  }
  func.func @transform_5(%arg0: i32) -> (i32, i32) {
    %c0_i32 = arith.constant 0 : i32
    %c0_i32_0 = arith.constant 0 : i32
    %c0_i32_1 = arith.constant 0 : i32
    return %c0_i32, %c0_i32_0 : i32, i32
  }
  func.func @transform_6(%arg0: i32) -> (i32, i32) {
    %c0_i32 = arith.constant 0 : i32
    %c0_i32_0 = arith.constant 0 : i32
    return %arg0, %c0_i32 : i32, i32
  }
}

</mosaic_0001>

<llo_original>
// kernel: tpu_custom_call.1
$region0: #{tpu_custom_call.1}
  #allocation0 [shape = 'u32[]', space=smem, size = 0x4, offset = 0x4, fixed_abs, tag = 'smem constant byte address 0x4 - core index']
  #allocation1 [shape = 'u32[144,128]{1,0:T(1,128)}', space=vmem, size = 0x12000, scoped, tag = 'internal scratch']
  %s0 = inlined_call_operand.hbm [shape: f32[8,128], index: 0, kind: input, shape index: {}]
  %s1 = inlined_call_operand.hbm [shape: f32[128,128], index: 1, kind: input, shape index: {}]
  %s2 = inlined_call_operand.vmem [shape: f32[1,128], index: 2, kind: input, shape index: {}]
  %s3 = inlined_call_operand.hbm [shape: f32[128,128], index: 3, kind: input, shape index: {}]
  %s4 = inlined_call_operand.vmem [shape: f32[1,128], index: 4, kind: input, shape index: {}]
  %s5 = inlined_call_operand.hbm [shape: f32[128,128], index: 5, kind: input, shape index: {}]
  %s6 = inlined_call_operand.hbm [shape: f32[8,128], index: 6, kind: output, shape index: {}]
  %s7 = sld [smem:[#allocation0]]
  $region50: #{tpu_custom_call.1} parent=0
    _
  %s9 = ssub.s32 1, %s7
  %s10 = scalar_select 0, %s9, %s7
  $region1: #{tpu_custom_call.1} parent=0
    #allocation2 [shape = 'u8[4096]{0}', space=vmem, size = 0x1000, scoped, tag = 'input window, operand 0, single buffered']
    #allocation3 [shape = 's32[1]{0}', space=sflag, size = 0x4, scoped, tag = 'scoped memory for tpu_custom_call.1']
    #allocation4 [shape = 's32[1]{0}', space=sflag, size = 0x4, scoped, tag = 'scoped memory for tpu_custom_call.1']
    #allocation5 [shape = 'u8[65536]{0}', space=vmem, size = 0x10000, scoped, tag = 'input window, operand 1, single buffered']
    #allocation6 [shape = 's32[1]{0}', space=sflag, size = 0x4, scoped, tag = 'scoped memory for tpu_custom_call.1']
    #allocation7 [shape = 'u8[65536]{0}', space=vmem, size = 0x10000, scoped, tag = 'input window, operand 3, single buffered']
    #allocation8 [shape = 'u8[65536]{0}', space=vmem, size = 0x10000, scoped, tag = 'input window, operand 5, single buffered']
    #allocation9 [shape = 's32[1]{0}', space=sflag, size = 0x4, scoped, tag = 'scoped memory for tpu_custom_call.1']
    #allocation10 [shape = 'u8[4096]{0}', space=vmem, size = 0x1000, scoped, tag = 'output window, operand 0, single buffered']
    %11 = vsyncpa [#allocation3], 0
    %12 = vsyncpa [#allocation6], 0
    %13 = vsyncpa [#allocation9], 0
    %14 = vsyncpa [#allocation4], 0
    // Predicated region
    $region2: #{tpu_custom_call.1} parent=1 // pred_check
      _
    $region3: #{tpu_custom_call.1} parent=1 // pred_check_branch
      %16 = sbr.rel (0) target = $region5
    $region4: #{tpu_custom_call.1} parent=1 // pred_region
      %s18 = ssub.s32 128, 128
      %19 = vsyncadd [#allocation3], %s18
      %s21 = sshll.u32 [#allocation2], 4
      %s22 = int_to_ptr.vmem [resolvable:$true] %s21
      %24 = dma.hbm_to_vmem [thread:$0]  %s0, 128, %s22, [#allocation3]
    $region5: #{tpu_custom_call.1} parent=1 // pred_fallthru
      _
    // Predicated region
    $region6: #{tpu_custom_call.1} parent=1 // pred_check
      _
    $region7: #{tpu_custom_call.1} parent=1 // pred_check_branch
      %26 = sbr.rel (0) target = $region9
    $region8: #{tpu_custom_call.1} parent=1 // pred_region
      %s28 = ssub.s32 2048, 2048
      %29 = vsyncadd [#allocation6], %s28
      %s30 = sshll.u32 [#allocation5], 4
      %s31 = int_to_ptr.vmem [resolvable:$true] %s30
      %36 = dma.hbm_to_vmem [thread:$0]  %s1, 2048, %s31, [#allocation6], 128, 128, 8
    $region9: #{tpu_custom_call.1} parent=1 // pred_fallthru
      _
    // Predicated region
    $region10: #{tpu_custom_call.1} parent=1 // pred_check
      _
    $region11: #{tpu_custom_call.1} parent=1 // pred_check_branch
      %38 = sbr.rel (0) target = $region13
    $region12: #{tpu_custom_call.1} parent=1 // pred_region
      _
    $region13: #{tpu_custom_call.1} parent=1 // pred_fallthru
      _
    // Predicated region
    $region14: #{tpu_custom_call.1} parent=1 // pred_check
      _
    $region15: #{tpu_custom_call.1} parent=1 // pred_check_branch
      %40 = sbr.rel (0) target = $region17
    $region16: #{tpu_custom_call.1} parent=1 // pred_region
      %s42 = ssub.s32 2048, 2048
      %43 = vsyncadd [#allocation6], %s42
      %s44 = sshll.u32 [#allocation7], 4
      %s45 = int_to_ptr.vmem [resolvable:$true] %s44
      %50 = dma.hbm_to_vmem [thread:$0]  %s3, 2048, %s45, [#allocation6], 128, 128, 8
    $region17: #{tpu_custom_call.1} parent=1 // pred_fallthru
      _
    // Predicated region
    $region18: #{tpu_custom_call.1} parent=1 // pred_check
      _
    $region19: #{tpu_custom_call.1} parent=1 // pred_check_branch
      %52 = sbr.rel (0) target = $region21
    $region20: #{tpu_custom_call.1} parent=1 // pred_region
      _
    $region21: #{tpu_custom_call.1} parent=1 // pred_fallthru
      _
    // Predicated region
    $region22: #{tpu_custom_call.1} parent=1 // pred_check
      _
    $region23: #{tpu_custom_call.1} parent=1 // pred_check_branch
      %54 = sbr.rel (0) target = $region25
    $region24: #{tpu_custom_call.1} parent=1 // pred_region
      %s56 = ssub.s32 2048, 2048
      %57 = vsyncadd [#allocation9], %s56
      %s58 = sshll.u32 [#allocation8], 4
      %s59 = int_to_ptr.vmem [resolvable:$true] %s58
      %64 = dma.hbm_to_vmem [thread:$0]  %s5, 2048, %s59, [#allocation9], 128, 128, 8
    $region25: #{tpu_custom_call.1} parent=1 // pred_fallthru
      _
    // Predicated region
    $region26: #{tpu_custom_call.1} parent=1 // pred_check
      _
    $region27: #{tpu_custom_call.1} parent=1 // pred_check_branch
      %66 = sbr.rel (0) target = $region29
    $region28: #{tpu_custom_call.1} parent=1 // pred_region
      %67 = dma.done [#allocation3], 128
    $region29: #{tpu_custom_call.1} parent=1 // pred_fallthru
      _
    // Predicated region
    $region30: #{tpu_custom_call.1} parent=1 // pred_check
      _
    $region31: #{tpu_custom_call.1} parent=1 // pred_check_branch
      %69 = sbr.rel (0) target = $region33
    $region32: #{tpu_custom_call.1} parent=1 // pred_region
      %70 = dma.done [#allocation6], 2048
    $region33: #{tpu_custom_call.1} parent=1 // pred_fallthru
      _
    // Predicated region
    $region34: #{tpu_custom_call.1} parent=1 // pred_check
      _
    $region35: #{tpu_custom_call.1} parent=1 // pred_check_branch
      %72 = sbr.rel (0) target = $region37
    $region36: #{tpu_custom_call.1} parent=1 // pred_region
      %73 = dma.done [#allocation6], 2048
    $region37: #{tpu_custom_call.1} parent=1 // pred_fallthru
      _
    // Predicated region
    $region38: #{tpu_custom_call.1} parent=1 // pred_check
      _
    $region39: #{tpu_custom_call.1} parent=1 // pred_check_branch
      %75 = sbr.rel (0) target = $region41
    $region40: #{tpu_custom_call.1} parent=1 // pred_region
      %76 = dma.done [#allocation9], 2048
    $region41: #{tpu_custom_call.1} parent=1 // pred_fallthru
      _
    %v77 = vld [vmem:[#allocation2] sm:$0xff]
    %v78 = vmax.f32 %v77, 0.0
    %v79 = vld [vmem:[#allocation5] sm:$0xff]
    %v80 = vld [vmem:[#allocation5 + $0x8] sm:$0xff]
    %v81 = vld [vmem:[#allocation5 + $0x10] sm:$0xff]
    %v82 = vld [vmem:[#allocation5 + $0x18] sm:$0xff]
    %v83 = vld [vmem:[#allocation5 + $0x20] sm:$0xff]
    %v84 = vld [vmem:[#allocation5 + $0x28] sm:$0xff]
    %v85 = vld [vmem:[#allocation5 + $0x30] sm:$0xff]
    %v86 = vld [vmem:[#allocation5 + $0x38] sm:$0xff]
    %v87 = vld [vmem:[#allocation5 + $0x40] sm:$0xff]
    %v88 = vld [vmem:[#allocation5 + $0x48] sm:$0xff]
    %v89 = vld [vmem:[#allocation5 + $0x50] sm:$0xff]
    %v90 = vld [vmem:[#allocation5 + $0x58] sm:$0xff]
    %v91 = vld [vmem:[#allocation5 + $0x60] sm:$0xff]
    %v92 = vld [vmem:[#allocation5 + $0x68] sm:$0xff]
    %v93 = vld [vmem:[#allocation5 + $0x70] sm:$0xff]
    %v94 = vld [vmem:[#allocation5 + $0x78] sm:$0xff]
    %v95 = vld [vmem:[%s2] sm:$0x1]
    %v97 = vlaneseq
    %v98 = vshrl.u32 %v97, 7
    %v99 = vsub.s32 0, %v98
    %v100 = vrot.slane %v95, %v99
    %102 = vmatprep.subr.mxu0 0.0
    %103 = vmatpush1.msra.mxu0 %v94
    %104 = vmatprep.subr.mxu0 0.0
    %105 = vmatpush1.msra.mxu0 %v93
    %106 = vmatprep.subr.mxu0 0.0
    %107 = vmatpush1.msra.mxu0 %v92
    %108 = vmatprep.subr.mxu0 0.0
    %109 = vmatpush1.msra.mxu0 %v91
    %110 = vmatprep.subr.mxu0 0.0
    %111 = vmatpush1.msra.mxu0 %v90
    %112 = vmatprep.subr.mxu0 0.0
    %113 = vmatpush1.msra.mxu0 %v89
    %114 = vmatprep.subr.mxu0 0.0
    %115 = vmatpush1.msra.mxu0 %v88
    %116 = vmatprep.subr.mxu0 0.0
    %117 = vmatpush1.msra.mxu0 %v87
    %118 = vmatprep.subr.mxu0 0.0
    %119 = vmatpush1.msra.mxu0 %v86
    %120 = vmatprep.subr.mxu0 0.0
    %121 = vmatpush1.msra.mxu0 %v85
    %122 = vmatprep.subr.mxu0 0.0
    %123 = vmatpush1.msra.mxu0 %v84
    %124 = vmatprep.subr.mxu0 0.0
    %125 = vmatpush1.msra.mxu0 %v83
    %126 = vmatprep.subr.mxu0 0.0
    %127 = vmatpush1.msra.mxu0 %v82
    %128 = vmatprep.subr.mxu0 0.0
    %129 = vmatpush1.msra.mxu0 %v81
    %130 = vmatprep.subr.mxu0 0.0
    %131 = vmatpush1.msra.mxu0 %v80
    %132 = vmatprep.subr.mxu0 0.0
    %133 = vmatpush1.msra.mxu0 %v79
    %134 = vmatprep.subr.mxu0 0.0
    %135 = vmatpush2.msra.mxu0 0.0
    %136 = vmatprep.subr.mxu0 0.0
    %137 = vmatpush2.msra.mxu0 0.0
    %138 = vmatprep.subr.mxu0 0.0
    %139 = vmatpush2.msra.mxu0 0.0
    %140 = vmatprep.subr.mxu0 0.0
    %141 = vmatpush2.msra.mxu0 0.0
    %142 = vmatprep.subr.mxu0 0.0
    %143 = vmatpush2.msra.mxu0 0.0
    %144 = vmatprep.subr.mxu0 0.0
    %145 = vmatpush2.msra.mxu0 0.0
    %146 = vmatprep.subr.mxu0 0.0
    %147 = vmatpush2.msra.mxu0 0.0
    %148 = vmatprep.subr.mxu0 0.0
    %149 = vmatpush2.msra.mxu0 0.0
    %150 = vmatprep.subr.mxu0 0.0
    %151 = vmatpush2.msra.mxu0 0.0
    %152 = vmatprep.subr.mxu0 0.0
    %153 = vmatpush2.msra.mxu0 0.0
    %154 = vmatprep.subr.mxu0 0.0
    %155 = vmatpush2.msra.mxu0 0.0
    %156 = vmatprep.subr.mxu0 0.0
    %157 = vmatpush2.msra.mxu0 0.0
    %158 = vmatprep.subr.mxu0 0.0
    %159 = vmatpush2.msra.mxu0 0.0
    %160 = vmatprep.subr.mxu0 0.0
    %161 = vmatpush2.msra.mxu0 0.0
    %162 = vmatprep.subr.mxu0 0.0
    %163 = vmatpush2.msra.mxu0 0.0
    %164 = vmatprep.subr.mxu0 0.0
    %165 = vmatpush2.msra.mxu0 0.0
    %166 = vmatprep.mubr.f32.mxu0 0.0
    %167 = vmatmul.mubr.f32.gmra.mxu0 %v78
    %v168 = vpop.f32.mrf.mxu0
    %v169 = vadd.f32 %v100, %v168
    %v170 = vpop.f32.mrf.mxu0
    %171 = vdwg.mxu0
    %v172 = vmax.f32 %v169, 0.0
    %v173 = vld [vmem:[#allocation7] sm:$0xff]
    %v174 = vld [vmem:[#allocation7 + $0x8] sm:$0xff]
    %v175 = vld [vmem:[#allocation7 + $0x10] sm:$0xff]
    %v176 = vld [vmem:[#allocation7 + $0x18] sm:$0xff]
    %v177 = vld [vmem:[#allocation7 + $0x20] sm:$0xff]
    %v178 = vld [vmem:[#allocation7 + $0x28] sm:$0xff]
    %v179 = vld [vmem:[#allocation7 + $0x30] sm:$0xff]
    %v180 = vld [vmem:[#allocation7 + $0x38] sm:$0xff]
    %v181 = vld [vmem:[#allocation7 + $0x40] sm:$0xff]
    %v182 = vld [vmem:[#allocation7 + $0x48] sm:$0xff]
    %v183 = vld [vmem:[#allocation7 + $0x50] sm:$0xff]
    %v184 = vld [vmem:[#allocation7 + $0x58] sm:$0xff]
    %v185 = vld [vmem:[#allocation7 + $0x60] sm:$0xff]
    %v186 = vld [vmem:[#allocation7 + $0x68] sm:$0xff]
    %v187 = vld [vmem:[#allocation7 + $0x70] sm:$0xff]
    %v188 = vld [vmem:[#allocation7 + $0x78] sm:$0xff]
    %v189 = vld [vmem:[%s4] sm:$0x1]
    %v191 = vlaneseq
    %v192 = vshrl.u32 %v191, 7
    %v193 = vsub.s32 0, %v192
    %v194 = vrot.slane %v189, %v193
    %196 = vmatprep.subr.mxu0 0.0
    %197 = vmatpush1.msra.mxu0 %v188
    %198 = vmatprep.subr.mxu0 0.0
    %199 = vmatpush1.msra.mxu0 %v187
    %200 = vmatprep.subr.mxu0 0.0
    %201 = vmatpush1.msra.mxu0 %v186
    %202 = vmatprep.subr.mxu0 0.0
    %203 = vmatpush1.msra.mxu0 %v185
    %204 = vmatprep.subr.mxu0 0.0
    %205 = vmatpush1.msra.mxu0 %v184
    %206 = vmatprep.subr.mxu0 0.0
    %207 = vmatpush1.msra.mxu0 %v183
    %208 = vmatprep.subr.mxu0 0.0
    %209 = vmatpush1.msra.mxu0 %v182
    %210 = vmatprep.subr.mxu0 0.0
    %211 = vmatpush1.msra.mxu0 %v181
    %212 = vmatprep.subr.mxu0 0.0
    %213 = vmatpush1.msra.mxu0 %v180
    %214 = vmatprep.subr.mxu0 0.0
    %215 = vmatpush1.msra.mxu0 %v179
    %216 = vmatprep.subr.mxu0 0.0
    %217 = vmatpush1.msra.mxu0 %v178
    %218 = vmatprep.subr.mxu0 0.0
    %219 = vmatpush1.msra.mxu0 %v177
    %220 = vmatprep.subr.mxu0 0.0
    %221 = vmatpush1.msra.mxu0 %v176
    %222 = vmatprep.subr.mxu0 0.0
    %223 = vmatpush1.msra.mxu0 %v175
    %224 = vmatprep.subr.mxu0 0.0
    %225 = vmatpush1.msra.mxu0 %v174
    %226 = vmatprep.subr.mxu0 0.0
    %227 = vmatpush1.msra.mxu0 %v173
    %228 = vmatprep.subr.mxu0 0.0
    %229 = vmatpush2.msra.mxu0 0.0
    %230 = vmatprep.subr.mxu0 0.0
    %231 = vmatpush2.msra.mxu0 0.0
    %232 = vmatprep.subr.mxu0 0.0
    %233 = vmatpush2.msra.mxu0 0.0
    %234 = vmatprep.subr.mxu0 0.0
    %235 = vmatpush2.msra.mxu0 0.0
    %236 = vmatprep.subr.mxu0 0.0
    %237 = vmatpush2.msra.mxu0 0.0
    %238 = vmatprep.subr.mxu0 0.0
    %239 = vmatpush2.msra.mxu0 0.0
    %240 = vmatprep.subr.mxu0 0.0
    %241 = vmatpush2.msra.mxu0 0.0
    %242 = vmatprep.subr.mxu0 0.0
    %243 = vmatpush2.msra.mxu0 0.0
    %244 = vmatprep.subr.mxu0 0.0
    %245 = vmatpush2.msra.mxu0 0.0
    %246 = vmatprep.subr.mxu0 0.0
    %247 = vmatpush2.msra.mxu0 0.0
    %248 = vmatprep.subr.mxu0 0.0
    %249 = vmatpush2.msra.mxu0 0.0
    %250 = vmatprep.subr.mxu0 0.0
    %251 = vmatpush2.msra.mxu0 0.0
    %252 = vmatprep.subr.mxu0 0.0
    %253 = vmatpush2.msra.mxu0 0.0
    %254 = vmatprep.subr.mxu0 0.0
    %255 = vmatpush2.msra.mxu0 0.0
    %256 = vmatprep.subr.mxu0 0.0
    %257 = vmatpush2.msra.mxu0 0.0
    %258 = vmatprep.subr.mxu0 0.0
    %259 = vmatpush2.msra.mxu0 0.0
    %260 = vmatprep.mubr.f32.mxu0 0.0
    %261 = vmatmul.mubr.f32.gmra.mxu0 %v172
    %v262 = vpop.f32.mrf.mxu0
    %v263 = vadd.f32 %v194, %v262
    %v264 = vpop.f32.mrf.mxu0
    %265 = vdwg.mxu0
    %v266 = vld [vmem:[#allocation8] sm:$0xff]
    %v267 = vld [vmem:[#allocation8 + $0x8] sm:$0xff]
    %v268 = vld [vmem:[#allocation8 + $0x10] sm:$0xff]
    %v269 = vld [vmem:[#allocation8 + $0x18] sm:$0xff]
    %v270 = vld [vmem:[#allocation8 + $0x20] sm:$0xff]
    %v271 = vld [vmem:[#allocation8 + $0x28] sm:$0xff]
    %v272 = vld [vmem:[#allocation8 + $0x30] sm:$0xff]
    %v273 = vld [vmem:[#allocation8 + $0x38] sm:$0xff]
    %v274 = vld [vmem:[#allocation8 + $0x40] sm:$0xff]
    %v275 = vld [vmem:[#allocation8 + $0x48] sm:$0xff]
    %v276 = vld [vmem:[#allocation8 + $0x50] sm:$0xff]
    %v277 = vld [vmem:[#allocation8 + $0x58] sm:$0xff]
    %v278 = vld [vmem:[#allocation8 + $0x60] sm:$0xff]
    %v279 = vld [vmem:[#allocation8 + $0x68] sm:$0xff]
    %v280 = vld [vmem:[#allocation8 + $0x70] sm:$0xff]
    %v281 = vld [vmem:[#allocation8 + $0x78] sm:$0xff]
    %282 = vmatprep.subr.mxu0 0.0
    %283 = vmatpush1.msra.mxu0 %v281
    %284 = vmatprep.subr.mxu0 0.0
    %285 = vmatpush1.msra.mxu0 %v280
    %286 = vmatprep.subr.mxu0 0.0
    %287 = vmatpush1.msra.mxu0 %v279
    %288 = vmatprep.subr.mxu0 0.0
    %289 = vmatpush1.msra.mxu0 %v278
    %290 = vmatprep.subr.mxu0 0.0
    %291 = vmatpush1.msra.mxu0 %v277
    %292 = vmatprep.subr.mxu0 0.0
    %293 = vmatpush1.msra.mxu0 %v276
    %294 = vmatprep.subr.mxu0 0.0
    %295 = vmatpush1.msra.mxu0 %v275
    %296 = vmatprep.subr.mxu0 0.0
    %297 = vmatpush1.msra.mxu0 %v274
    %298 = vmatprep.subr.mxu0 0.0
    %299 = vmatpush1.msra.mxu0 %v273
    %300 = vmatprep.subr.mxu0 0.0
    %301 = vmatpush1.msra.mxu0 %v272
    %302 = vmatprep.subr.mxu0 0.0
    %303 = vmatpush1.msra.mxu0 %v271
    %304 = vmatprep.subr.mxu0 0.0
    %305 = vmatpush1.msra.mxu0 %v270
    %306 = vmatprep.subr.mxu0 0.0
    %307 = vmatpush1.msra.mxu0 %v269
    %308 = vmatprep.subr.mxu0 0.0
    %309 = vmatpush1.msra.mxu0 %v268
    %310 = vmatprep.subr.mxu0 0.0
    %311 = vmatpush1.msra.mxu0 %v267
    %312 = vmatprep.subr.mxu0 0.0
    %313 = vmatpush1.msra.mxu0 %v266
    %314 = vmatprep.subr.mxu0 0.0
    %315 = vmatpush2.msra.mxu0 0.0
    %316 = vmatprep.subr.mxu0 0.0
    %317 = vmatpush2.msra.mxu0 0.0
    %318 = vmatprep.subr.mxu0 0.0
    %319 = vmatpush2.msra.mxu0 0.0
    %320 = vmatprep.subr.mxu0 0.0
    %321 = vmatpush2.msra.mxu0 0.0
    %322 = vmatprep.subr.mxu0 0.0
    %323 = vmatpush2.msra.mxu0 0.0
    %324 = vmatprep.subr.mxu0 0.0
    %325 = vmatpush2.msra.mxu0 0.0
    %326 = vmatprep.subr.mxu0 0.0
    %327 = vmatpush2.msra.mxu0 0.0
    %328 = vmatprep.subr.mxu0 0.0
    %329 = vmatpush2.msra.mxu0 0.0
    %330 = vmatprep.subr.mxu0 0.0
    %331 = vmatpush2.msra.mxu0 0.0
    %332 = vmatprep.subr.mxu0 0.0
    %333 = vmatpush2.msra.mxu0 0.0
    %334 = vmatprep.subr.mxu0 0.0
    %335 = vmatpush2.msra.mxu0 0.0
    %336 = vmatprep.subr.mxu0 0.0
    %337 = vmatpush2.msra.mxu0 0.0
    %338 = vmatprep.subr.mxu0 0.0
    %339 = vmatpush2.msra.mxu0 0.0
    %340 = vmatprep.subr.mxu0 0.0
    %341 = vmatpush2.msra.mxu0 0.0
    %342 = vmatprep.subr.mxu0 0.0
    %343 = vmatpush2.msra.mxu0 0.0
    %344 = vmatprep.subr.mxu0 0.0
    %345 = vmatpush2.msra.mxu0 0.0
    %346 = vmatprep.mubr.f32.mxu0 0.0
    %347 = vmatmul.mubr.f32.gmra.mxu0 %v77
    %v348 = vpop.f32.mrf.mxu0
    %v349 = vadd.f32 0.0, %v348
    %v350 = vpop.f32.mrf.mxu0
    %351 = vdwg.mxu0
    %v352 = vadd.f32 %v263, %v349
    %353 = vst [vmem:[#allocation10] sm:$0xff] %v352
    // Predicated region
    $region42: #{tpu_custom_call.1} parent=1 // pred_check
      _
    $region43: #{tpu_custom_call.1} parent=1 // pred_check_branch
      %355 = sbr.rel (0) target = $region45
    $region44: #{tpu_custom_call.1} parent=1 // pred_region
      %s357 = ssub.s32 128, 128
      %358 = vsyncadd [#allocation4], %s357
      %s360 = sshll.u32 [#allocation10], 4
      %s361 = int_to_ptr.vmem [resolvable:$true] %s360
      %363 = dma.vmem_to_hbm [thread:$0]  %s361, 128, %s6, [#allocation4]
    $region45: #{tpu_custom_call.1} parent=1 // pred_fallthru
      _
    // Predicated region
    $region46: #{tpu_custom_call.1} parent=1 // pred_check
      _
    $region47: #{tpu_custom_call.1} parent=1 // pred_check_branch
      %365 = sbr.rel (0) target = $region49
    $region48: #{tpu_custom_call.1} parent=1 // pred_region
      %366 = dma.done [#allocation4], 128
    $region49: #{tpu_custom_call.1} parent=1 // pred_fallthru
      _
    %367 = vsyncpa [#allocation3], 1
    %368 = vsyncpa [#allocation6], 1
    %369 = vsyncpa [#allocation9], 1
    %370 = vsyncpa [#allocation4], 1

</llo_original>
